<compile_context>
chip_gen: v7x
topology: tpu7x:2x2x1
jax: 0.10.0
libtpu: 0.0.40
codegen_flags: <defaults>
</compile_context>

<pallas_src>
import functools

import jax
import jax.numpy as jnp
from jax.experimental import pallas as pl
from jax.experimental.pallas import tpu as pltpu

_EPS = 1e-8  # PyTorch F.cosine_similarity default eps


def _contrast_loss_kernel(hi_ref, hp_ref, hn_ref, out_ref, *, inv_temp):
    hi = hi_ref[...].astype(jnp.float32)      # (TB, Dp)
    hp = hp_ref[...].astype(jnp.float32)      # (TB, Dp)
    hn = hn_ref[...].astype(jnp.float32)      # (TB, N, Dp)

    # 1 / max(||x||, eps) == min(rsqrt(||x||^2), 1/eps).
    # rsqrt runs on the EUP slot, min on the VPU; clamp-before-multiply also
    # keeps zero-padded batch rows NaN-free.
    inv_hi = jnp.minimum(
        jax.lax.rsqrt(jnp.sum(hi * hi, axis=-1, keepdims=True)), 1.0 / _EPS)  # (TB, 1)
    inv_hp = jnp.minimum(
        jax.lax.rsqrt(jnp.sum(hp * hp, axis=-1, keepdims=True)), 1.0 / _EPS)  # (TB, 1)
    inv_hn = jnp.minimum(
        jax.lax.rsqrt(jnp.sum(hn * hn, axis=-1)), 1.0 / _EPS)                 # (TB, N)

    cos_p = jnp.sum(hi * hp, axis=-1, keepdims=True) * inv_hi * inv_hp        # (TB, 1)
    cos_n = jnp.sum(hi[:, None, :] * hn, axis=-1) * inv_hi * inv_hn           # (TB, N)

    # loss = -log(s1/(s1+s2)) = log(1 + sum_j exp((cos_n_j - cos_p)/T)).
    # (cos_n - cos_p)/T <= 2/T, so this is f32-safe for any realistic T / N.
    z = jnp.exp((cos_n - cos_p) * inv_temp)                                    # (TB, N)
    loss = jnp.log(1.0 + jnp.sum(z, axis=-1, keepdims=True))                   # (TB, 1)

    # Lane-dense (TB, 128) store -> unmasked vst; wrapper reads column 0.
    out_ref[...] = jnp.broadcast_to(loss, out_ref.shape)


def one_side_contrast_loss_batched(h_i, h_p, h_n_sample, temperature=0.07,
                                   block_b=None):
    """Batched forward.

    h_i: (B, D), h_p: (B, D), h_n_sample: (B, N, D)  ->  (B,) f32 losses.
    """
    b, d = h_i.shape
    n = h_n_sample.shape[1]

    # Zero-pad feature dim to a lane-dense multiple of 128 (zeros don't change
    # dot products or norms).
    dp = ((d + 127) // 128) * 128

    # Adaptive batch tile: cover small batches in one grid step, cap the tile
    # so double-buffered VMEM stays tiny even for larger N / D.
    if block_b is None:
        block_b = min(256, ((b + 7) // 8) * 8)
    block_b = max(8, ((block_b + 7) // 8) * 8)
    b_pad = ((b + block_b - 1) // block_b) * block_b

    pad_d = dp - d
    pad_b = b_pad - b
    hi = jnp.pad(h_i, ((0, pad_b), (0, pad_d)))
    hp = jnp.pad(h_p, ((0, pad_b), (0, pad_d)))
    hn = jnp.pad(h_n_sample, ((0, pad_b), (0, 0), (0, pad_d)))

    num_tiles = b_pad // block_b
    kernel = functools.partial(_contrast_loss_kernel, inv_temp=1.0 / temperature)

    out = pl.pallas_call(
        kernel,
        out_shape=jax.ShapeDtypeStruct((b_pad, 128), jnp.float32),
        grid=(num_tiles,),
        in_specs=[
            pl.BlockSpec((block_b, dp), lambda i: (i, 0)),
            pl.BlockSpec((block_b, dp), lambda i: (i, 0)),
            pl.BlockSpec((block_b, n, dp), lambda i: (i, 0, 0)),
        ],
        out_specs=pl.BlockSpec((block_b, 128), lambda i: (i, 0)),
        compiler_params=pltpu.CompilerParams(
            dimension_semantics=("parallel",)),   # megacore split on v7x
    )(hi, hp, hn)

    return out[:b, 0]


def one_side_contrast_loss(h_i, h_p, h_n_sample, temperature=0.07):
    """Single-triplet forward matching the PyTorch module.

    h_i: (D,), h_p: (D,), h_n_sample: (N, D)  ->  scalar f32 loss.
    """
    losses = one_side_contrast_loss_batched(
        h_i[None], h_p[None], h_n_sample[None], temperature=temperature)
    return losses[0]


def _reference(h_i, h_p, h_n_sample, temperature=0.07):
    """Pure-JAX reference mirroring the PyTorch forward (per-norm eps clamp)."""
    def cos(a, b):
        na = jnp.maximum(jnp.linalg.norm(a, axis=-1), _EPS)
        nb = jnp.maximum(jnp.linalg.norm(b, axis=-1), _EPS)
        return jnp.sum(a * b, axis=-1) / (na * nb)

    hi = h_i[None, :]
    hp = h_p[None, :]
    n = h_n_sample.shape[0]
    sim_1 = jnp.sum(jnp.exp(cos(hi, hp) / temperature))
    sim_2 = jnp.sum(jnp.exp(cos(jnp.tile(hi, (n, 1)), h_n_sample) / temperature))
    return -jnp.log(sim_1 / (sim_1 + sim_2))


if __name__ == "__main__":
    key = jax.random.PRNGKey(0)
    k1, k2, k3, k4, k5, k6 = jax.random.split(key, 6)

    D = 32   # feature/hidden dim
    N = 8    # number of negative samples
    B = 5    # batch of loss instances (non-multiple of 8 to exercise padding)

    # --- single-triplet path (original module semantics) ---
    h_i = jax.random.normal(k1, (D,), dtype=jnp.float32)
    h_p = jax.random.normal(k2, (D,), dtype=jnp.float32)
    h_n = jax.random.normal(k3, (N, D), dtype=jnp.float32)

    loss = one_side_contrast_loss(h_i, h_p, h_n, temperature=0.07)
    jax.block_until_ready(loss)
    ref = _reference(h_i, h_p, h_n, temperature=0.07)
    assert jnp.allclose(loss, ref, rtol=1e-5, atol=1e-5), (loss, ref)

    # --- batched path (one pallas_call for B triplets) ---
    hib = jax.random.normal(k4, (B, D), dtype=jnp.float32)
    hpb = jax.random.normal(k5, (B, D), dtype=jnp.float32)
    hnb = jax.random.normal(k6, (B, N, D), dtype=jnp.float32)

    losses = one_side_contrast_loss_batched(hib, hpb, hnb, temperature=0.07)
    jax.block_until_ready(losses)
    refs = jax.vmap(lambda a, p, neg: _reference(a, p, neg, 0.07))(hib, hpb, hnb)
    assert losses.shape == (B,)
    assert jnp.allclose(losses, refs, rtol=1e-5, atol=1e-5), (losses, refs)

    print("KERNEL_OK")
</pallas_src>

<mosaic_0001>
module attributes {stable_mosaic.version = 11 : i64} {
  func.func @_contrast_loss_kernel(%arg0: i32, %arg1: memref<8x128xf32, #tpu.memory_space<vmem>>, %arg2: memref<8x128xf32, #tpu.memory_space<vmem>>, %arg3: memref<8x8x128xf32, #tpu.memory_space<vmem>>, %arg4: memref<8x128xf32, #tpu.memory_space<vmem>>) attributes {dimension_semantics = [#tpu.dimension_semantics<parallel>], iteration_bounds = array<i64: 1>, scalar_prefetch = 0 : i64, scratch_operands = 0 : i64, tpu.core_type = #tpu.core_type<tc>, window_params = [{transform_indices = @transform_0, window_bounds = array<i64: 8, 128>}, {transform_indices = @transform_1, window_bounds = array<i64: 8, 128>}, {transform_indices = @transform_2, window_bounds = array<i64: 8, 8, 128>}, {transform_indices = @transform_3, window_bounds = array<i64: 8, 128>}]} {
    %c0 = arith.constant 0 : index
    %c0_0 = arith.constant 0 : index
    %0 = vector.load %arg1[%c0, %c0_0] : memref<8x128xf32, #tpu.memory_space<vmem>>, vector<8x128xf32>
    %c0_1 = arith.constant 0 : index
    %c0_2 = arith.constant 0 : index
    %1 = vector.load %arg2[%c0_1, %c0_2] : memref<8x128xf32, #tpu.memory_space<vmem>>, vector<8x128xf32>
    %c0_3 = arith.constant 0 : index
    %c0_4 = arith.constant 0 : index
    %c0_5 = arith.constant 0 : index
    %2 = vector.load %arg3[%c0_3, %c0_4, %c0_5] : memref<8x8x128xf32, #tpu.memory_space<vmem>>, vector<8x8x128xf32>
    %3 = arith.mulf %0, %0 : vector<8x128xf32>
    %cst = arith.constant dense<0.000000e+00> : vector<8xf32>
    %4 = vector.multi_reduction <add>, %3, %cst [1] : vector<8x128xf32> to vector<8xf32>
    %5 = vector.shape_cast %4 : vector<8xf32> to vector<8x1xf32>
    %6 = math.rsqrt %5 : vector<8x1xf32>
    %cst_6 = arith.constant 1.000000e+08 : f32
    %7 = vector.broadcast %cst_6 : f32 to vector<8x1xf32>
    %8 = arith.minimumf %6, %7 : vector<8x1xf32>
    %9 = arith.mulf %1, %1 : vector<8x128xf32>
    %cst_7 = arith.constant dense<0.000000e+00> : vector<8xf32>
    %10 = vector.multi_reduction <add>, %9, %cst_7 [1] : vector<8x128xf32> to vector<8xf32>
    %11 = vector.shape_cast %10 : vector<8xf32> to vector<8x1xf32>
    %12 = math.rsqrt %11 : vector<8x1xf32>
    %cst_8 = arith.constant 1.000000e+08 : f32
    %13 = vector.broadcast %cst_8 : f32 to vector<8x1xf32>
    %14 = arith.minimumf %12, %13 : vector<8x1xf32>
    %15 = arith.mulf %2, %2 : vector<8x8x128xf32>
    %cst_9 = arith.constant dense<0.000000e+00> : vector<8x8xf32>
    %16 = vector.multi_reduction <add>, %15, %cst_9 [2] : vector<8x8x128xf32> to vector<8x8xf32>
    %17 = math.rsqrt %16 : vector<8x8xf32>
    %cst_10 = arith.constant 1.000000e+08 : f32
    %18 = vector.broadcast %cst_10 : f32 to vector<8x8xf32>
    %19 = arith.minimumf %17, %18 : vector<8x8xf32>
    %20 = arith.mulf %0, %1 : vector<8x128xf32>
    %cst_11 = arith.constant dense<0.000000e+00> : vector<8xf32>
    %21 = vector.multi_reduction <add>, %20, %cst_11 [1] : vector<8x128xf32> to vector<8xf32>
    %22 = vector.shape_cast %21 : vector<8xf32> to vector<8x1xf32>
    %23 = arith.mulf %22, %8 : vector<8x1xf32>
    %24 = arith.mulf %23, %14 : vector<8x1xf32>
    %25 = vector.shape_cast %0 : vector<8x128xf32> to vector<8x1x128xf32>
    %26 = vector.broadcast %25 : vector<8x1x128xf32> to vector<8x8x128xf32>
    %27 = arith.mulf %26, %2 : vector<8x8x128xf32>
    %cst_12 = arith.constant dense<0.000000e+00> : vector<8x8xf32>
    %28 = vector.multi_reduction <add>, %27, %cst_12 [2] : vector<8x8x128xf32> to vector<8x8xf32>
    %29 = vector.broadcast %8 : vector<8x1xf32> to vector<8x8xf32>
    %30 = arith.mulf %28, %29 : vector<8x8xf32>
    %31 = arith.mulf %30, %19 : vector<8x8xf32>
    %32 = vector.broadcast %24 : vector<8x1xf32> to vector<8x8xf32>
    %33 = arith.subf %31, %32 : vector<8x8xf32>
    %cst_13 = arith.constant 14.2857141 : f32
    %34 = vector.broadcast %cst_13 : f32 to vector<8x8xf32>
    %35 = arith.mulf %33, %34 : vector<8x8xf32>
    %36 = math.exp %35 : vector<8x8xf32>
    %cst_14 = arith.constant dense<0.000000e+00> : vector<8xf32>
    %37 = vector.multi_reduction <add>, %36, %cst_14 [1] : vector<8x8xf32> to vector<8xf32>
    %38 = vector.shape_cast %37 : vector<8xf32> to vector<8x1xf32>
    %cst_15 = arith.constant 1.000000e+00 : f32
    %39 = vector.broadcast %cst_15 : f32 to vector<8x1xf32>
    %40 = arith.addf %39, %38 : vector<8x1xf32>
    %41 = math.log %40 : vector<8x1xf32>
    %42 = vector.shape_cast %41 : vector<8x1xf32> to vector<8x1xf32>
    %43 = vector.broadcast %42 : vector<8x1xf32> to vector<8x128xf32>
    %c0_16 = arith.constant 0 : index
    %c0_17 = arith.constant 0 : index
    %44 = vector.load %arg4[%c0_16, %c0_17] : memref<8x128xf32, #tpu.memory_space<vmem>>, vector<8x128xf32>
    tpu.vector_store %arg4[%c0_16, %c0_17], %43 {strides = array<i32>} : memref<8x128xf32, #tpu.memory_space<vmem>>, vector<8x128xf32>,
    return
  }
  func.func @transform_0(%arg0: i32) -> (i32, i32) {
    %c0_i32 = arith.constant 0 : i32
    %c0_i32_0 = arith.constant 0 : i32
    return %arg0, %c0_i32 : i32, i32
  }
  func.func @transform_1(%arg0: i32) -> (i32, i32) {
    %c0_i32 = arith.constant 0 : i32
    %c0_i32_0 = arith.constant 0 : i32
    return %arg0, %c0_i32 : i32, i32
  }
  func.func @transform_2(%arg0: i32) -> (i32, i32, i32) {
    %c0_i32 = arith.constant 0 : i32
    %c0_i32_0 = arith.constant 0 : i32
    %c0_i32_1 = arith.constant 0 : i32
    return %arg0, %c0_i32, %c0_i32_0 : i32, i32, i32
  }
  func.func @transform_3(%arg0: i32) -> (i32, i32) {
    %c0_i32 = arith.constant 0 : i32
    %c0_i32_0 = arith.constant 0 : i32
    return %arg0, %c0_i32 : i32, i32
  }
}

</mosaic_0001>

<llo_original>
// kernel: tpu_custom_call.1
$region0: #{tpu_custom_call.1}
  #allocation0 [shape = 'u32[]', space=smem, size = 0x4, offset = 0x4, fixed_abs, tag = 'smem constant byte address 0x4 - core index']
  #allocation1 [shape = 'u32[144,128]{1,0:T(1,128)}', space=vmem, size = 0x12000, scoped, tag = 'internal scratch']
  %s0 = inlined_call_operand.hbm [shape: f32[8,128], index: 0, kind: input, shape index: {}]
  %s1 = inlined_call_operand.hbm [shape: f32[8,128], index: 1, kind: input, shape index: {}]
  %s2 = inlined_call_operand.hbm [shape: f32[8,8,128], index: 2, kind: input, shape index: {}]
  %s3 = inlined_call_operand.hbm [shape: f32[8,128], index: 3, kind: output, shape index: {}]
  %s4 = sld [smem:[#allocation0]]
  $region34: #{tpu_custom_call.1} parent=0
    _
  %s6 = ssub.s32 1, %s4
  %s7 = scalar_select 0, %s6, %s4
  $region1: #{tpu_custom_call.1} parent=0
    #allocation2 [shape = 'u8[4096]{0}', space=vmem, size = 0x1000, scoped, tag = 'input window, operand 0, single buffered']
    #allocation3 [shape = 's32[1]{0}', space=sflag, size = 0x4, scoped, tag = 'scoped memory for tpu_custom_call.1']
    #allocation4 [shape = 's32[1]{0}', space=sflag, size = 0x4, scoped, tag = 'scoped memory for tpu_custom_call.1']
    #allocation5 [shape = 'u8[4096]{0}', space=vmem, size = 0x1000, scoped, tag = 'input window, operand 1, single buffered']
    #allocation6 [shape = 's32[1]{0}', space=sflag, size = 0x4, scoped, tag = 'scoped memory for tpu_custom_call.1']
    #allocation7 [shape = 'u8[32768]{0}', space=vmem, size = 0x8000, scoped, tag = 'input window, operand 2, single buffered']
    #allocation8 [shape = 'u8[4096]{0}', space=vmem, size = 0x1000, scoped, tag = 'output window, operand 0, single buffered']
    %8 = vsyncpa [#allocation3], 0
    %9 = vsyncpa [#allocation6], 0
    %10 = vsyncpa [#allocation4], 0
    // Predicated region
    $region2: #{tpu_custom_call.1} parent=1 // pred_check
      _
    $region3: #{tpu_custom_call.1} parent=1 // pred_check_branch
      %12 = sbr.rel (0) target = $region5
    $region4: #{tpu_custom_call.1} parent=1 // pred_region
      %s14 = ssub.s32 128, 128
      %15 = vsyncadd [#allocation3], %s14
      %s17 = sshll.u32 [#allocation2], 4
      %s18 = int_to_ptr.vmem [resolvable:$true] %s17
      %20 = dma.hbm_to_vmem [thread:$0]  %s0, 128, %s18, [#allocation3]
    $region5: #{tpu_custom_call.1} parent=1 // pred_fallthru
      _
    // Predicated region
    $region6: #{tpu_custom_call.1} parent=1 // pred_check
      _
    $region7: #{tpu_custom_call.1} parent=1 // pred_check_branch
      %22 = sbr.rel (0) target = $region9
    $region8: #{tpu_custom_call.1} parent=1 // pred_region
      %s24 = ssub.s32 128, 128
      %25 = vsyncadd [#allocation6], %s24
      %s27 = sshll.u32 [#allocation5], 4
      %s28 = int_to_ptr.vmem [resolvable:$true] %s27
      %30 = dma.hbm_to_vmem [thread:$0]  %s1, 128, %s28, [#allocation6]
    $region9: #{tpu_custom_call.1} parent=1 // pred_fallthru
      _
    // Predicated region
    $region10: #{tpu_custom_call.1} parent=1 // pred_check
      _
    $region11: #{tpu_custom_call.1} parent=1 // pred_check_branch
      %32 = sbr.rel (0) target = $region13
    $region12: #{tpu_custom_call.1} parent=1 // pred_region
      %s34 = ssub.s32 1024, 1024
      %35 = vsyncadd [#allocation6], %s34
      %s36 = sshll.u32 [#allocation7], 4
      %s37 = int_to_ptr.vmem [resolvable:$true] %s36
      %42 = dma.hbm_to_vmem [thread:$0]  %s2, 1024, %s37, [#allocation6], 128, 128, 8
    $region13: #{tpu_custom_call.1} parent=1 // pred_fallthru
      _
    // Predicated region
    $region14: #{tpu_custom_call.1} parent=1 // pred_check
      _
    $region15: #{tpu_custom_call.1} parent=1 // pred_check_branch
      %44 = sbr.rel (0) target = $region17
    $region16: #{tpu_custom_call.1} parent=1 // pred_region
      %45 = dma.done [#allocation3], 128
    $region17: #{tpu_custom_call.1} parent=1 // pred_fallthru
      _
    // Predicated region
    $region18: #{tpu_custom_call.1} parent=1 // pred_check
      _
    $region19: #{tpu_custom_call.1} parent=1 // pred_check_branch
      %47 = sbr.rel (0) target = $region21
    $region20: #{tpu_custom_call.1} parent=1 // pred_region
      %48 = dma.done [#allocation6], 128
    $region21: #{tpu_custom_call.1} parent=1 // pred_fallthru
      _
    // Predicated region
    $region22: #{tpu_custom_call.1} parent=1 // pred_check
      _
    $region23: #{tpu_custom_call.1} parent=1 // pred_check_branch
      %50 = sbr.rel (0) target = $region25
    $region24: #{tpu_custom_call.1} parent=1 // pred_region
      %51 = dma.done [#allocation6], 1024
    $region25: #{tpu_custom_call.1} parent=1 // pred_fallthru
      _
    %v52 = vld [vmem:[#allocation2] sm:$0xff]
    %v53 = vld [vmem:[#allocation5] sm:$0xff]
    %v54 = vld [vmem:[#allocation7] sm:$0xff]
    %v55 = vld [vmem:[#allocation7 + $0x8] sm:$0xff]
    %v56 = vld [vmem:[#allocation7 + $0x10] sm:$0xff]
    %v57 = vld [vmem:[#allocation7 + $0x18] sm:$0xff]
    %v58 = vld [vmem:[#allocation7 + $0x20] sm:$0xff]
    %v59 = vld [vmem:[#allocation7 + $0x28] sm:$0xff]
    %v60 = vld [vmem:[#allocation7 + $0x30] sm:$0xff]
    %v61 = vld [vmem:[#allocation7 + $0x38] sm:$0xff]
    %v62 = vmul.f32 %v52, %v52
    %63 = vadd.xlane.f32.xlu0 %v62
    %v64 = vpop.xlane.xlu0 %63
    %v65 = vrsqrt.pop %v64
    %v66 = vmin.f32 %v65, 1e+08
    %v67 = vmul.f32 %v53, %v53
    %68 = vadd.xlane.f32.xlu0 %v67
    %v69 = vpop.xlane.xlu0 %68
    %v70 = vrsqrt.pop %v69
    %v71 = vmin.f32 %v70, 1e+08
    %v72 = vmul.f32 %v54, %v54
    %v73 = vmul.f32 %v55, %v55
    %v74 = vmul.f32 %v56, %v56
    %v75 = vmul.f32 %v57, %v57
    %v76 = vmul.f32 %v58, %v58
    %v77 = vmul.f32 %v59, %v59
    %v78 = vmul.f32 %v60, %v60
    %v79 = vmul.f32 %v61, %v61
    %80 = vadd.xlane.f32.xlu0 %v72
    %v81 = vpop.xlane.xlu0 %80
    %82 = vadd.xlane.f32.xlu0 %v73
    %v83 = vpop.xlane.xlu0 %82
    %84 = vadd.xlane.f32.xlu0 %v74
    %v85 = vpop.xlane.xlu0 %84
    %86 = vadd.xlane.f32.xlu0 %v75
    %v87 = vpop.xlane.xlu0 %86
    %88 = vadd.xlane.f32.xlu0 %v76
    %v89 = vpop.xlane.xlu0 %88
    %90 = vadd.xlane.f32.xlu0 %v77
    %v91 = vpop.xlane.xlu0 %90
    %92 = vadd.xlane.f32.xlu0 %v78
    %v93 = vpop.xlane.xlu0 %92
    %94 = vadd.xlane.f32.xlu0 %v79
    %v95 = vpop.xlane.xlu0 %94
    %v96 = vrsqrt.pop %v81
    %v97 = vrsqrt.pop %v83
    %v98 = vrsqrt.pop %v85
    %v99 = vrsqrt.pop %v87
    %v100 = vrsqrt.pop %v89
    %v101 = vrsqrt.pop %v91
    %v102 = vrsqrt.pop %v93
    %v103 = vrsqrt.pop %v95
    %v104 = vmin.f32 %v96, 1e+08
    %v105 = vmin.f32 %v97, 1e+08
    %v106 = vmin.f32 %v98, 1e+08
    %v107 = vmin.f32 %v99, 1e+08
    %v108 = vmin.f32 %v100, 1e+08
    %v109 = vmin.f32 %v101, 1e+08
    %v110 = vmin.f32 %v102, 1e+08
    %v111 = vmin.f32 %v103, 1e+08
    %v112 = vmul.f32 %v52, %v53
    %113 = vadd.xlane.f32.xlu0 %v112
    %v114 = vpop.xlane.xlu0 %113
    %v115 = vmul.f32 %v114, %v66
    %v116 = vmul.f32 %v115, %v71
    %v118 = vcombine.high %v52, %v52
    %v120 = vunpack.c.l.s4 1966171168
    %v121 = vunpack.c.0.s8 %v120
    %v122 = vlaneseq
    %v123 = vshrl.u32 %v122, 7
    %v124 = vsub.s32 %v121, %v123
    %v125 = vrot.slane %v52, %v124
    %v127 = vunpack.c.l.s4 1966171168
    %v128 = vunpack.c.0.s8 %v127
    %v129 = vlaneseq
    %v130 = vshrl.u32 %v129, 7
    %v131 = vsub.s32 %v128, %v130
    %v132 = vrot.slane %v118, %v131
    %v133 = vcombine.high %v125, %v125
    %v134 = vcombine.high %v132, %v132
    %v136 = vunpack.c.l.s4 1966171168
    %v137 = vunpack.c.0.s8 %v136
    %v138 = vlaneseq
    %v139 = vshrl.u32 %v138, 7
    %v140 = vsub.s32 %v137, %v139
    %v141 = vrot.slane %v125, %v140
    %v143 = vunpack.c.l.s4 1966171168
    %v144 = vunpack.c.0.s8 %v143
    %v145 = vlaneseq
    %v146 = vshrl.u32 %v145, 7
    %v147 = vsub.s32 %v144, %v146
    %v148 = vrot.slane %v132, %v147
    %v150 = vunpack.c.l.s4 1966171168
    %v151 = vunpack.c.0.s8 %v150
    %v152 = vlaneseq
    %v153 = vshrl.u32 %v152, 7
    %v154 = vsub.s32 %v151, %v153
    %v155 = vrot.slane %v133, %v154
    %v157 = vunpack.c.l.s4 1966171168
    %v158 = vunpack.c.0.s8 %v157
    %v159 = vlaneseq
    %v160 = vshrl.u32 %v159, 7
    %v161 = vsub.s32 %v158, %v160
    %v162 = vrot.slane %v134, %v161
    %v163 = vcombine.high %v141, %v141
    %v164 = vcombine.high %v148, %v148
    %v165 = vcombine.high %v155, %v155
    %v166 = vcombine.high %v162, %v162
    %v167 = vlaneseq
    %v168 = vshrl.u32 %v167, 7
    %v169 = vsub.s32 0, %v168
    %v170 = vrot.slane %v141, %v169
    %v171 = vlaneseq
    %v172 = vshrl.u32 %v171, 7
    %v173 = vsub.s32 0, %v172
    %v174 = vrot.slane %v155, %v173
    %v175 = vlaneseq
    %v176 = vshrl.u32 %v175, 7
    %v177 = vsub.s32 0, %v176
    %v178 = vrot.slane %v163, %v177
    %v179 = vlaneseq
    %v180 = vshrl.u32 %v179, 7
    %v181 = vsub.s32 0, %v180
    %v182 = vrot.slane %v165, %v181
    %v183 = vlaneseq
    %v184 = vshrl.u32 %v183, 7
    %v185 = vsub.s32 0, %v184
    %v186 = vrot.slane %v148, %v185
    %v187 = vlaneseq
    %v188 = vshrl.u32 %v187, 7
    %v189 = vsub.s32 0, %v188
    %v190 = vrot.slane %v162, %v189
    %v191 = vlaneseq
    %v192 = vshrl.u32 %v191, 7
    %v193 = vsub.s32 0, %v192
    %v194 = vrot.slane %v164, %v193
    %v195 = vlaneseq
    %v196 = vshrl.u32 %v195, 7
    %v197 = vsub.s32 0, %v196
    %v198 = vrot.slane %v166, %v197
    %v207 = vmul.f32 %v170, %v54
    %v208 = vmul.f32 %v174, %v55
    %v209 = vmul.f32 %v178, %v56
    %v210 = vmul.f32 %v182, %v57
    %v211 = vmul.f32 %v186, %v58
    %v212 = vmul.f32 %v190, %v59
    %v213 = vmul.f32 %v194, %v60
    %v214 = vmul.f32 %v198, %v61
    %215 = vadd.xlane.f32.xlu0 %v207
    %v216 = vpop.xlane.xlu0 %215
    %217 = vadd.xlane.f32.xlu0 %v208
    %v218 = vpop.xlane.xlu0 %217
    %219 = vadd.xlane.f32.xlu0 %v209
    %v220 = vpop.xlane.xlu0 %219
    %221 = vadd.xlane.f32.xlu0 %v210
    %v222 = vpop.xlane.xlu0 %221
    %223 = vadd.xlane.f32.xlu0 %v211
    %v224 = vpop.xlane.xlu0 %223
    %225 = vadd.xlane.f32.xlu0 %v212
    %v226 = vpop.xlane.xlu0 %225
    %227 = vadd.xlane.f32.xlu0 %v213
    %v228 = vpop.xlane.xlu0 %227
    %229 = vadd.xlane.f32.xlu0 %v214
    %v230 = vpop.xlane.xlu0 %229
    %v232 = vlaneseq
    %v233 = vshrl.u32 %v232, 7
    %v234 = vsub.s32 0, %v233
    %v235 = vrot.slane %v66, %v234
    %v236 = vlaneseq
    %v237 = vshrl.u32 %v236, 7
    %v238 = vsub.s32 1, %v237
    %v239 = vrot.slane %v66, %v238
    %v240 = vlaneseq
    %v241 = vshrl.u32 %v240, 7
    %v242 = vsub.s32 2, %v241
    %v243 = vrot.slane %v66, %v242
    %v244 = vlaneseq
    %v245 = vshrl.u32 %v244, 7
    %v246 = vsub.s32 3, %v245
    %v247 = vrot.slane %v66, %v246
    %v248 = vlaneseq
    %v249 = vshrl.u32 %v248, 7
    %v250 = vsub.s32 4, %v249
    %v251 = vrot.slane %v66, %v250
    %v252 = vlaneseq
    %v253 = vshrl.u32 %v252, 7
    %v254 = vsub.s32 5, %v253
    %v255 = vrot.slane %v66, %v254
    %v256 = vlaneseq
    %v257 = vshrl.u32 %v256, 7
    %v258 = vsub.s32 6, %v257
    %v259 = vrot.slane %v66, %v258
    %v260 = vlaneseq
    %v261 = vshrl.u32 %v260, 7
    %v262 = vsub.s32 7, %v261
    %v263 = vrot.slane %v66, %v262
    %v272 = vmul.f32 %v216, %v235
    %v273 = vmul.f32 %v218, %v239
    %v274 = vmul.f32 %v220, %v243
    %v275 = vmul.f32 %v222, %v247
    %v276 = vmul.f32 %v224, %v251
    %v277 = vmul.f32 %v226, %v255
    %v278 = vmul.f32 %v228, %v259
    %v279 = vmul.f32 %v230, %v263
    %v280 = vmul.f32 %v272, %v104
    %v281 = vmul.f32 %v273, %v105
    %v282 = vmul.f32 %v274, %v106
    %v283 = vmul.f32 %v275, %v107
    %v284 = vmul.f32 %v276, %v108
    %v285 = vmul.f32 %v277, %v109
    %v286 = vmul.f32 %v278, %v110
    %v287 = vmul.f32 %v279, %v111
    %v289 = vlaneseq
    %v290 = vshrl.u32 %v289, 7
    %v291 = vsub.s32 0, %v290
    %v292 = vrot.slane %v116, %v291
    %v293 = vlaneseq
    %v294 = vshrl.u32 %v293, 7
    %v295 = vsub.s32 1, %v294
    %v296 = vrot.slane %v116, %v295
    %v297 = vlaneseq
    %v298 = vshrl.u32 %v297, 7
    %v299 = vsub.s32 2, %v298
    %v300 = vrot.slane %v116, %v299
    %v301 = vlaneseq
    %v302 = vshrl.u32 %v301, 7
    %v303 = vsub.s32 3, %v302
    %v304 = vrot.slane %v116, %v303
    %v305 = vlaneseq
    %v306 = vshrl.u32 %v305, 7
    %v307 = vsub.s32 4, %v306
    %v308 = vrot.slane %v116, %v307
    %v309 = vlaneseq
    %v310 = vshrl.u32 %v309, 7
    %v311 = vsub.s32 5, %v310
    %v312 = vrot.slane %v116, %v311
    %v313 = vlaneseq
    %v314 = vshrl.u32 %v313, 7
    %v315 = vsub.s32 6, %v314
    %v316 = vrot.slane %v116, %v315
    %v317 = vlaneseq
    %v318 = vshrl.u32 %v317, 7
    %v319 = vsub.s32 7, %v318
    %v320 = vrot.slane %v116, %v319
    %v329 = vsub.f32 %v280, %v292
    %v330 = vsub.f32 %v281, %v296
    %v331 = vsub.f32 %v282, %v300
    %v332 = vsub.f32 %v283, %v304
    %v333 = vsub.f32 %v284, %v308
    %v334 = vsub.f32 %v285, %v312
    %v335 = vsub.f32 %v286, %v316
    %v336 = vsub.f32 %v287, %v320
    %v337 = vmul.f32 %v329, 14.285714
    %v338 = vmul.f32 %v330, 14.285714
    %v339 = vmul.f32 %v331, 14.285714
    %v340 = vmul.f32 %v332, 14.285714
    %v341 = vmul.f32 %v333, 14.285714
    %v342 = vmul.f32 %v334, 14.285714
    %v343 = vmul.f32 %v335, 14.285714
    %v344 = vmul.f32 %v336, 14.285714
    %v345 = vmul.f32 %v337, 1.442695
    %v346 = vpow.pop %v345
    %v347 = vmul.f32 %v338, 1.442695
    %v348 = vpow.pop %v347
    %v349 = vmul.f32 %v339, 1.442695
    %v350 = vpow.pop %v349
    %v351 = vmul.f32 %v340, 1.442695
    %v352 = vpow.pop %v351
    %v353 = vmul.f32 %v341, 1.442695
    %v354 = vpow.pop %v353
    %v355 = vmul.f32 %v342, 1.442695
    %v356 = vpow.pop %v355
    %v357 = vmul.f32 %v343, 1.442695
    %v358 = vpow.pop %v357
    %v359 = vmul.f32 %v344, 1.442695
    %v360 = vpow.pop %v359
    %369 = vset.pattern.permute.xlu0 0
    %370 = vperm.xlu0 %369, %v346
    %v371 = vpop.permute.xlu0 %370
    %372 = vset.pattern.permute.xlu0 0
    %373 = vperm.xlu0 %372, %v348
    %v374 = vpop.permute.xlu0 %373
    %375 = vset.pattern.permute.xlu0 0
    %376 = vperm.xlu0 %375, %v350
    %v377 = vpop.permute.xlu0 %376
    %378 = vset.pattern.permute.xlu0 0
    %379 = vperm.xlu0 %378, %v352
    %v380 = vpop.permute.xlu0 %379
    %381 = vset.pattern.permute.xlu0 0
    %382 = vperm.xlu0 %381, %v354
    %v383 = vpop.permute.xlu0 %382
    %384 = vset.pattern.permute.xlu0 0
    %385 = vperm.xlu0 %384, %v356
    %v386 = vpop.permute.xlu0 %385
    %387 = vset.pattern.permute.xlu0 0
    %388 = vperm.xlu0 %387, %v358
    %v389 = vpop.permute.xlu0 %388
    %390 = vset.pattern.permute.xlu0 0
    %391 = vperm.xlu0 %390, %v360
    %v392 = vpop.permute.xlu0 %391
    %v393 = vlaneseq
    %v394 = vand.u32 %v393, 127
    %v395 = vlaneseq
    %v396 = vshrl.u32 %v395, 7
    %v397 = vsub.s32 %v394, %v396
    %v398 = vrot.slane %v371, %v397
    %v399 = vlaneseq
    %v400 = vshrl.u32 %v399, 7
    %v401 = vsub.s32 %v394, %v400
    %v402 = vrot.slane %v374, %v401
    %v403 = vlaneseq
    %v404 = vshrl.u32 %v403, 7
    %v405 = vsub.s32 %v394, %v404
    %v406 = vrot.slane %v377, %v405
    %v407 = vlaneseq
    %v408 = vshrl.u32 %v407, 7
    %v409 = vsub.s32 %v394, %v408
    %v410 = vrot.slane %v380, %v409
    %v411 = vlaneseq
    %v412 = vshrl.u32 %v411, 7
    %v413 = vsub.s32 %v394, %v412
    %v414 = vrot.slane %v383, %v413
    %v415 = vlaneseq
    %v416 = vshrl.u32 %v415, 7
    %v417 = vsub.s32 %v394, %v416
    %v418 = vrot.slane %v386, %v417
    %v419 = vlaneseq
    %v420 = vshrl.u32 %v419, 7
    %v421 = vsub.s32 %v394, %v420
    %v422 = vrot.slane %v389, %v421
    %v423 = vlaneseq
    %v424 = vshrl.u32 %v423, 7
    %v425 = vsub.s32 %v394, %v424
    %v426 = vrot.slane %v392, %v425
    %vm427 = vcmask 1041409
    %v428 = vsel %vm427, %v402, %v398
    %vm429 = vcmask 1042434
    %v430 = vsel %vm429, %v406, %v428
    %vm431 = vcmask 1043459
    %v432 = vsel %vm431, %v410, %v430
    %vm433 = vcmask 1044484
    %v434 = vsel %vm433, %v414, %v432
    %vm435 = vcmask 1045509
    %v436 = vsel %vm435, %v418, %v434
    %vm437 = vcmask 1046534
    %v438 = vsel %vm437, %v422, %v436
    %vm439 = vcmask 1047559
    %v440 = vsel %vm439, %v426, %v438
    %vm442 = vcmask 64512
    %v443 = vsel %vm442, %v440, 0.0
    %444 = vadd.xlane.f32.xlu0 %v443
    %v445 = vpop.xlane.xlu0 %444
    %v446 = vadd.f32 %v445, 1.0
    %v447 = vlog2.pop %v446
    %v448 = vmul.f32 %v447, 0.6931472
    %449 = vst [vmem:[#allocation8] sm:$0xff] %v448
    // Predicated region
    $region26: #{tpu_custom_call.1} parent=1 // pred_check
      _
    $region27: #{tpu_custom_call.1} parent=1 // pred_check_branch
      %451 = sbr.rel (0) target = $region29
    $region28: #{tpu_custom_call.1} parent=1 // pred_region
      %s453 = ssub.s32 128, 128
      %454 = vsyncadd [#allocation4], %s453
      %s456 = sshll.u32 [#allocation8], 4
      %s457 = int_to_ptr.vmem [resolvable:$true] %s456
      %459 = dma.vmem_to_hbm [thread:$0]  %s457, 128, %s3, [#allocation4]
    $region29: #{tpu_custom_call.1} parent=1 // pred_fallthru
      _
    // Predicated region
    $region30: #{tpu_custom_call.1} parent=1 // pred_check
      _
    $region31: #{tpu_custom_call.1} parent=1 // pred_check_branch
      %461 = sbr.rel (0) target = $region33
    $region32: #{tpu_custom_call.1} parent=1 // pred_region
      %462 = dma.done [#allocation4], 128
    $region33: #{tpu_custom_call.1} parent=1 // pred_fallthru
      _
    %463 = vsyncpa [#allocation3], 1
    %464 = vsyncpa [#allocation6], 1
    %465 = vsyncpa [#allocation4], 1

</llo_original>
